<compile_context>
chip_gen: v6e
topology: v6e:2x2x1
jax: 0.10.0
libtpu: 0.0.40
codegen_flags: <defaults>
</compile_context>

<pallas_src>
import functools

import jax
import jax.numpy as jnp
from jax.experimental import pallas as pl
from jax.experimental.pallas import tpu as pltpu

NEG_SLOPE = 0.3

_VMEM_LIMIT_BYTES = 48 * 1024 * 1024   # explicit scoped-VMEM limit (fits v7x 64 MiB)
_BLOCK_VMEM_BUDGET = 36 * 1024 * 1024  # budget used to derive bt (leaves headroom)


def _lrelu(v):
    return jnp.where(v >= 0, v, NEG_SLOPE * v)


def inception_kernel(x_ref, wdiag_ref, bpw_ref, w2r_ref, w3r_ref, btap_ref, o_ref,
                     *, bt, Cin, L, Cout, k2, k3):
    """NCL inception block: x_ref (bt, Cin, L) -> o_ref (bt, 4*Cout, L)."""
    p2, p3 = k2 // 2, k3 // 2
    cdt = w2r_ref.dtype  # MXU-operand compute dtype (f32 or bf16)

    # ---- grid-step invariants, hoisted out of the per-sample loop ----------------
    wdiag = wdiag_ref[...]                  # (4C, 2*Cin) block-diag fused 1x1 weights
    w2r = w2r_ref[...]                      # (C, k2*C)   k=5 conv, taps folded into K
    w3r = w3r_ref[...]                      # (C, k3*C)   k=9 conv, taps folded into K
    bpw = bpw_ref[...]                      # (4C, 1) f32 [b1; b2a; b3a; b4]
    btap = btap_ref[...]                    # (2C, 1) f32 [b2b; b3b]
    # Bias lane-broadcasts hoisted (JAX does not CSE broadcast_in_dim).
    b_all = jnp.broadcast_to(bpw, (4 * Cout, L))
    b2b = jnp.broadcast_to(btap[:Cout], (Cout, L))
    b3b = jnp.broadcast_to(btap[Cout:], (Cout, L))
    zero2 = jnp.zeros((Cout, p2), cdt)
    zero3 = jnp.zeros((Cout, p3), cdt)
    ninf = jnp.full((Cin, 1), -jnp.inf, jnp.float32)

    def sample(i, carry):
        x = x_ref[i]                                        # (Cin, L)

        # Branch 4 maxpool (k=3, stride 1, -inf halo) — f32 elementwise (v5e-safe).
        xf = x.astype(jnp.float32)
        xl = jnp.concatenate([ninf, xf[:, :L - 1]], axis=1)
        xr = jnp.concatenate([xf[:, 1:], ninf], axis=1)
        m = jnp.maximum(jnp.maximum(xl, xf), xr)

        # ALL four 1x1 convs as ONE matmul: block-diag weight @ [x ; maxpool(x)].
        rhs = jnp.concatenate([x.astype(cdt), m.astype(cdt)], axis=0)   # (2*Cin, L)
        h_all = jnp.dot(wdiag, rhs, preferred_element_type=jnp.float32) + b_all
        y1 = _lrelu(h_all[0 * Cout:1 * Cout])               # branch 1 (done)
        h2 = _lrelu(h_all[1 * Cout:2 * Cout]).astype(cdt)   # single (C,L) cast
        h3 = _lrelu(h_all[2 * Cout:3 * Cout]).astype(cdt)   # single (C,L) cast
        y4 = h_all[3 * Cout:4 * Cout]                       # branch 4: no activation

        # Branch 2: k=5 conv as one matmul over a register-resident im2col slab.
        hp2 = jnp.concatenate([zero2, h2, zero2], axis=1)                 # (C, L+2p2)
        slab2 = jnp.concatenate([hp2[:, t:t + L] for t in range(k2)], axis=0)
        y2 = _lrelu(jnp.dot(w2r, slab2, preferred_element_type=jnp.float32) + b2b)

        # Branch 3: k=9 conv, same single-matmul im2col trick.
        hp3 = jnp.concatenate([zero3, h3, zero3], axis=1)                 # (C, L+2p3)
        slab3 = jnp.concatenate([hp3[:, t:t + L] for t in range(k3)], axis=0)
        y3 = _lrelu(jnp.dot(w3r, slab3, preferred_element_type=jnp.float32) + b3b)

        # Channel concat of the four branches for this sample, one store.
        o_ref[i] = jnp.concatenate([y1, y2, y3, y4], axis=0).astype(o_ref.dtype)
        return carry

    jax.lax.fori_loop(0, bt, sample, 0, unroll=min(2, bt))


def _tile_padded_bytes(r, c, dtype):
    """Bytes of an (r, c) array padded to TPU (sublane, lane) vreg tiles."""
    item = jnp.dtype(dtype).itemsize
    sub = 8 * max(1, 4 // item)          # (8,128) f32, (16,128) bf16
    rr = -(-r // sub) * sub
    cc = -(-c // 128) * 128
    return rr * cc * item


def _pick_block_b(B, per_sample_bytes, fixed_bytes, budget_bytes):
    """Largest divisor of B whose double-buffered x/out blocks (+ weights) fit the
    VMEM budget.  Prefer an EVEN number (>= 2) of grid steps so the 'parallel' batch
    axis load-balances across v7x's two TensorCores; among those, take the largest bt
    (fewest steps) to amortize the ~0.35 us per-grid-step overhead."""
    divisors = [d for d in range(1, B + 1) if B % d == 0]
    fits = [d for d in divisors
            if fixed_bytes + 2 * d * per_sample_bytes <= budget_bytes] or [1]
    even = [d for d in fits if (B // d) >= 2 and (B // d) % 2 == 0]
    if even:
        return max(even)
    ge2 = [d for d in fits if (B // d) >= 2]
    if ge2:
        return max(ge2)
    return max(fits)


@functools.partial(jax.jit, static_argnames=("compute_dtype",))
def inception_blk(x_ncl, params, *, compute_dtype=jnp.float32):
    """x_ncl: (B, Cin, L) float32, PyTorch NCL. Returns (B, 4*Cout, L) float32."""
    B, Cin, L = x_ncl.shape
    Cout = params["w1"].shape[1]
    k2 = params["w2b"].shape[0]
    k3 = params["w3b"].shape[0]
    cdt = jnp.dtype(compute_dtype)

    # ---- host-side packing: 13 params -> 5 grid-invariant arrays -----------------
    # Block-diagonal fused 1x1 weight: rows [0,3C) act on x, rows [3C,4C) on maxpool(x).
    wtop = jnp.concatenate([params["w1"].T, params["w2a"].T, params["w3a"].T], axis=0)
    wdiag = jnp.zeros((4 * Cout, 2 * Cin), jnp.float32)
    wdiag = wdiag.at[:3 * Cout, :Cin].set(wtop)
    wdiag = wdiag.at[3 * Cout:, Cin:].set(params["w4"].T)
    wdiag = wdiag.astype(cdt)                                          # (4C, 2Cin)
    bpw = jnp.concatenate([params["b1"].T, params["b2a"].T,
                           params["b3a"].T, params["b4"].T],
                          axis=0).astype(jnp.float32)                  # (4C, 1)
    # (K, Cin_h, Cout) -> (Cout, K*Cin_h): conv taps fold into the MXU K dim.
    w2r = jnp.transpose(params["w2b"], (2, 0, 1)).reshape(Cout, k2 * Cout).astype(cdt)
    w3r = jnp.transpose(params["w3b"], (2, 0, 1)).reshape(Cout, k3 * Cout).astype(cdt)
    btap = jnp.concatenate([params["b2b"].T, params["b3b"].T],
                           axis=0).astype(jnp.float32)                 # (2C, 1)

    x = x_ncl.astype(cdt)

    # ---- VMEM-derived samples-per-block + grid -----------------------------------
    per_sample = (_tile_padded_bytes(Cin, L, cdt)
                  + _tile_padded_bytes(4 * Cout, L, jnp.float32))
    fixed = 2 * (_tile_padded_bytes(4 * Cout, 2 * Cin, cdt)
                 + _tile_padded_bytes(Cout, k2 * Cout, cdt)
                 + _tile_padded_bytes(Cout, k3 * Cout, cdt)
                 + _tile_padded_bytes(4 * Cout, 1, jnp.float32)
                 + _tile_padded_bytes(2 * Cout, 1, jnp.float32))
    bt = _pick_block_b(B, per_sample, fixed, _BLOCK_VMEM_BUDGET)
    grid = (B // bt,)

    kernel = functools.partial(inception_kernel,
                               bt=bt, Cin=Cin, L=L, Cout=Cout, k2=k2, k3=k3)
    wmap = lambda b: (0, 0)

    flops = 2 * B * L * (4 * Cout * 2 * Cin + Cout * Cout * (k2 + k3))
    bytes_accessed = (x.size * cdt.itemsize + B * 4 * Cout * L * 4
                      + (wdiag.size + w2r.size + w3r.size) * cdt.itemsize
                      + (bpw.size + btap.size) * 4)

    return pl.pallas_call(
        kernel,
        out_shape=jax.ShapeDtypeStruct((B, 4 * Cout, L), jnp.float32),
        grid_spec=pltpu.PrefetchScalarGridSpec(
            num_scalar_prefetch=0,
            grid=grid,
            in_specs=[
                pl.BlockSpec((bt, Cin, L), lambda b: (b, 0, 0)),       # x (NCL)
                pl.BlockSpec((4 * Cout, 2 * Cin), wmap),               # fused 1x1 W
                pl.BlockSpec((4 * Cout, 1), wmap),                     # packed 1x1 b
                pl.BlockSpec((Cout, k2 * Cout), wmap),                 # k=5 conv W
                pl.BlockSpec((Cout, k3 * Cout), wmap),                 # k=9 conv W
                pl.BlockSpec((2 * Cout, 1), wmap),                     # tap-conv b
            ],
            out_specs=pl.BlockSpec((bt, 4 * Cout, L), lambda b: (b, 0, 0)),
            scratch_shapes=[],
        ),
        compiler_params=pltpu.CompilerParams(
            dimension_semantics=("parallel",),
            vmem_limit_bytes=_VMEM_LIMIT_BYTES),
        cost_estimate=pl.CostEstimate(flops=flops, transcendentals=0,
                                      bytes_accessed=bytes_accessed),
    )(x, wdiag, bpw, w2r, w3r, btap)


# ----------------------------- pure-JAX reference ---------------------------------
def ref_inception(x_ncl, P):
    def lrelu(v):
        return jnp.where(v >= 0, v, NEG_SLOPE * v)

    def conv1(h, w, b):  # h: (B, C, L), w: (C, O), b: (1, O)
        return jnp.einsum('bcl,co->bol', h, w) + b.reshape(1, -1, 1)

    def convk(h, w, b, pad):  # w: (K, C, O)
        K = w.shape[0]
        Lh = h.shape[2]
        hp = jnp.pad(h, ((0, 0), (0, 0), (pad, pad)))
        out = jnp.zeros((h.shape[0], w.shape[2], Lh), jnp.float32)
        for t in range(K):
            out = out + jnp.einsum('bcl,co->bol', hp[:, :, t:t + Lh], w[t])
        return out + b.reshape(1, -1, 1)

    x1 = lrelu(conv1(x_ncl, P['w1'], P['b1']))
    x2 = lrelu(convk(lrelu(conv1(x_ncl, P['w2a'], P['b2a'])), P['w2b'], P['b2b'], 2))
    x3 = lrelu(convk(lrelu(conv1(x_ncl, P['w3a'], P['b3a'])), P['w3b'], P['b3b'], 4))
    xp = jnp.pad(x_ncl, ((0, 0), (0, 0), (1, 1)), constant_values=-jnp.inf)
    m = jnp.maximum(jnp.maximum(xp[:, :, 0:-2], xp[:, :, 1:-1]), xp[:, :, 2:])
    x4 = conv1(m, P['w4'], P['b4'])
    return jnp.concatenate([x1, x2, x3, x4], axis=1)


if __name__ == "__main__":
    B, Cin, Cout, L = 2, 4, 8, 16

    key = jax.random.PRNGKey(0)
    keys = jax.random.split(key, 13)

    def init(k, shape, scale=0.1):
        return scale * jax.random.normal(k, shape, jnp.float32)

    params = {
        "w1":  init(keys[0], (Cin, Cout)),  "b1":  init(keys[1], (1, Cout)),
        "w2a": init(keys[2], (Cin, Cout)),  "b2a": init(keys[3], (1, Cout)),
        "w2b": init(keys[4], (5, Cout, Cout)), "b2b": init(keys[5], (1, Cout)),
        "w3a": init(keys[6], (Cin, Cout)),  "b3a": init(keys[7], (1, Cout)),
        "w3b": init(keys[8], (9, Cout, Cout)), "b3b": init(keys[9], (1, Cout)),
        "w4":  init(keys[10], (Cin, Cout)), "b4":  init(keys[11], (1, Cout)),
    }
    x = init(keys[12], (B, Cin, L), scale=1.0)  # PyTorch NCL input

    ref = jax.block_until_ready(ref_inception(x, params))

    # f32 path (matches the reference to float tolerance).
    out = jax.block_until_ready(inception_blk(x, params, compute_dtype=jnp.float32))
    assert out.shape == (B, 4 * Cout, L), out.shape
    assert jnp.allclose(out, ref, atol=1e-4, rtol=1e-4), \
        f"f32 max abs err = {jnp.max(jnp.abs(out - ref))}"

    # bf16 MXU-operand path (f32 accumulation) — the v6e/v7x fast path.
    out_bf16 = jax.block_until_ready(
        inception_blk(x, params, compute_dtype=jnp.bfloat16))
    assert jnp.allclose(out_bf16, ref, atol=5e-2, rtol=5e-2), \
        f"bf16 max abs err = {jnp.max(jnp.abs(out_bf16 - ref))}"

    print("KERNEL_OK")
</pallas_src>

<mosaic_0001>
module attributes {stable_mosaic.version = 11 : i64} {
  func.func @inception_kernel(%arg0: i32, %arg1: memref<1x4x16xf32, #tpu.memory_space<vmem>>, %arg2: memref<32x8xf32, #tpu.memory_space<vmem>>, %arg3: memref<32x1xf32, #tpu.memory_space<vmem>>, %arg4: memref<8x40xf32, #tpu.memory_space<vmem>>, %arg5: memref<8x72xf32, #tpu.memory_space<vmem>>, %arg6: memref<16x1xf32, #tpu.memory_space<vmem>>, %arg7: memref<1x32x16xf32, #tpu.memory_space<vmem>>) attributes {dimension_semantics = [#tpu.dimension_semantics<parallel>], iteration_bounds = array<i64: 2>, scalar_prefetch = 0 : i64, scratch_operands = 0 : i64, tpu.core_type = #tpu.core_type<tc>, window_params = [{transform_indices = @transform_0, window_bounds = array<i64: 1, 4, 16>}, {pipeline_mode = #tpu.pipeline_mode<synchronous>, transform_indices = @transform_1, window_bounds = array<i64: 32, 8>}, {pipeline_mode = #tpu.pipeline_mode<synchronous>, transform_indices = @transform_2, window_bounds = array<i64: 32, 1>}, {pipeline_mode = #tpu.pipeline_mode<synchronous>, transform_indices = @transform_3, window_bounds = array<i64: 8, 40>}, {pipeline_mode = #tpu.pipeline_mode<synchronous>, transform_indices = @transform_4, window_bounds = array<i64: 8, 72>}, {pipeline_mode = #tpu.pipeline_mode<synchronous>, transform_indices = @transform_5, window_bounds = array<i64: 16, 1>}, {transform_indices = @transform_6, window_bounds = array<i64: 1, 32, 16>}]} {
    %c0 = arith.constant 0 : index
    %c0_0 = arith.constant 0 : index
    %0 = vector.load %arg2[%c0, %c0_0] : memref<32x8xf32, #tpu.memory_space<vmem>>, vector<32x8xf32>
    %c0_1 = arith.constant 0 : index
    %c0_2 = arith.constant 0 : index
    %1 = vector.load %arg4[%c0_1, %c0_2] : memref<8x40xf32, #tpu.memory_space<vmem>>, vector<8x40xf32>
    %c0_3 = arith.constant 0 : index
    %c0_4 = arith.constant 0 : index
    %2 = vector.load %arg5[%c0_3, %c0_4] : memref<8x72xf32, #tpu.memory_space<vmem>>, vector<8x72xf32>
    %c0_5 = arith.constant 0 : index
    %c0_6 = arith.constant 0 : index
    %3 = vector.load %arg3[%c0_5, %c0_6] : memref<32x1xf32, #tpu.memory_space<vmem>>, vector<32x1xf32>
    %c0_7 = arith.constant 0 : index
    %c0_8 = arith.constant 0 : index
    %4 = vector.load %arg6[%c0_7, %c0_8] : memref<16x1xf32, #tpu.memory_space<vmem>>, vector<16x1xf32>
    %5 = vector.shape_cast %3 : vector<32x1xf32> to vector<32x1xf32>
    %6 = vector.broadcast %5 : vector<32x1xf32> to vector<32x16xf32>
    %7 = vector.extract_strided_slice %4 {offsets = [0, 0], sizes = [8, 1], strides = [1, 1]} : vector<16x1xf32> to vector<8x1xf32>
    %8 = vector.shape_cast %7 : vector<8x1xf32> to vector<8x1xf32>
    %9 = vector.broadcast %8 : vector<8x1xf32> to vector<8x16xf32>
    %10 = vector.extract_strided_slice %4 {offsets = [8, 0], sizes = [8, 1], strides = [1, 1]} : vector<16x1xf32> to vector<8x1xf32>
    %11 = vector.shape_cast %10 : vector<8x1xf32> to vector<8x1xf32>
    %12 = vector.broadcast %11 : vector<8x1xf32> to vector<8x16xf32>
    %cst = arith.constant 0.000000e+00 : f32
    %13 = vector.broadcast %cst : f32 to vector<8x2xf32>
    %cst_9 = arith.constant 0.000000e+00 : f32
    %14 = vector.broadcast %cst_9 : f32 to vector<8x4xf32>
    %cst_10 = arith.constant 0xFF800000 : f32
    %15 = vector.broadcast %cst_10 : f32 to vector<4x1xf32>
    %c0_i32 = arith.constant 0 : i32
    %16 = arith.index_cast %c0_i32 : i32 to index
    %c0_11 = arith.constant 0 : index
    %c0_12 = arith.constant 0 : index
    %17 = vector.load %arg1[%16, %c0_11, %c0_12] : memref<1x4x16xf32, #tpu.memory_space<vmem>>, vector<1x4x16xf32>
    %18 = vector.shape_cast %17 : vector<1x4x16xf32> to vector<4x16xf32>
    %19 = vector.extract_strided_slice %18 {offsets = [0, 0], sizes = [4, 15], strides = [1, 1]} : vector<4x16xf32> to vector<4x15xf32>
    %20 = tpu.concatenate %15, %19 in 1 : vector<4x1xf32>, vector<4x15xf32> -> vector<4x16xf32>
    %21 = vector.extract_strided_slice %18 {offsets = [0, 1], sizes = [4, 15], strides = [1, 1]} : vector<4x16xf32> to vector<4x15xf32>
    %22 = tpu.concatenate %21, %15 in 1 : vector<4x15xf32>, vector<4x1xf32> -> vector<4x16xf32>
    %23 = arith.maximumf %20, %18 : vector<4x16xf32>
    %24 = arith.maximumf %23, %22 : vector<4x16xf32>
    %25 = tpu.concatenate %18, %24 in 0 : vector<4x16xf32>, vector<4x16xf32> -> vector<8x16xf32>
    %cst_13 = arith.constant dense<0.000000e+00> : vector<32x16xf32>
    %26 = tpu.matmul %0, %25, %cst_13 {dimension_numbers = #tpu.dot_dimension_numbers<[1], [0], [0], [1], [0, 0, 1, 1], [], []>} : vector<32x8xf32>, vector<8x16xf32>, vector<32x16xf32> -> vector<32x16xf32>
    %27 = arith.addf %26, %6 : vector<32x16xf32>
    %28 = vector.extract_strided_slice %27 {offsets = [0, 0], sizes = [8, 16], strides = [1, 1]} : vector<32x16xf32> to vector<8x16xf32>
    %cst_14 = arith.constant 0.000000e+00 : f32
    %29 = vector.broadcast %cst_14 : f32 to vector<8x16xf32>
    %30 = arith.cmpf oge, %28, %29 : vector<8x16xf32>
    %cst_15 = arith.constant 3.000000e-01 : f32
    %31 = vector.broadcast %cst_15 : f32 to vector<8x16xf32>
    %32 = arith.mulf %31, %28 : vector<8x16xf32>
    %33 = arith.select %30, %28, %32 : vector<8x16xi1>, vector<8x16xf32>
    %34 = vector.extract_strided_slice %27 {offsets = [8, 0], sizes = [8, 16], strides = [1, 1]} : vector<32x16xf32> to vector<8x16xf32>
    %cst_16 = arith.constant 0.000000e+00 : f32
    %35 = vector.broadcast %cst_16 : f32 to vector<8x16xf32>
    %36 = arith.cmpf oge, %34, %35 : vector<8x16xf32>
    %cst_17 = arith.constant 3.000000e-01 : f32
    %37 = vector.broadcast %cst_17 : f32 to vector<8x16xf32>
    %38 = arith.mulf %37, %34 : vector<8x16xf32>
    %39 = arith.select %36, %34, %38 : vector<8x16xi1>, vector<8x16xf32>
    %40 = vector.extract_strided_slice %27 {offsets = [16, 0], sizes = [8, 16], strides = [1, 1]} : vector<32x16xf32> to vector<8x16xf32>
    %cst_18 = arith.constant 0.000000e+00 : f32
    %41 = vector.broadcast %cst_18 : f32 to vector<8x16xf32>
    %42 = arith.cmpf oge, %40, %41 : vector<8x16xf32>
    %cst_19 = arith.constant 3.000000e-01 : f32
    %43 = vector.broadcast %cst_19 : f32 to vector<8x16xf32>
    %44 = arith.mulf %43, %40 : vector<8x16xf32>
    %45 = arith.select %42, %40, %44 : vector<8x16xi1>, vector<8x16xf32>
    %46 = vector.extract_strided_slice %27 {offsets = [24, 0], sizes = [8, 16], strides = [1, 1]} : vector<32x16xf32> to vector<8x16xf32>
    %47 = tpu.concatenate %13, %39, %13 in 1 : vector<8x2xf32>, vector<8x16xf32>, vector<8x2xf32> -> vector<8x20xf32>
    %48 = vector.extract_strided_slice %47 {offsets = [0, 0], sizes = [8, 16], strides = [1, 1]} : vector<8x20xf32> to vector<8x16xf32>
    %49 = vector.extract_strided_slice %47 {offsets = [0, 1], sizes = [8, 16], strides = [1, 1]} : vector<8x20xf32> to vector<8x16xf32>
    %50 = vector.extract_strided_slice %47 {offsets = [0, 2], sizes = [8, 16], strides = [1, 1]} : vector<8x20xf32> to vector<8x16xf32>
    %51 = vector.extract_strided_slice %47 {offsets = [0, 3], sizes = [8, 16], strides = [1, 1]} : vector<8x20xf32> to vector<8x16xf32>
    %52 = vector.extract_strided_slice %47 {offsets = [0, 4], sizes = [8, 16], strides = [1, 1]} : vector<8x20xf32> to vector<8x16xf32>
    %53 = tpu.concatenate %48, %49, %50, %51, %52 in 0 : vector<8x16xf32>, vector<8x16xf32>, vector<8x16xf32>, vector<8x16xf32>, vector<8x16xf32> -> vector<40x16xf32>
    %cst_20 = arith.constant dense<0.000000e+00> : vector<8x16xf32>
    %54 = tpu.matmul %1, %53, %cst_20 {dimension_numbers = #tpu.dot_dimension_numbers<[1], [0], [0], [1], [0, 0, 1, 1], [], []>} : vector<8x40xf32>, vector<40x16xf32>, vector<8x16xf32> -> vector<8x16xf32>
    %55 = arith.addf %54, %9 : vector<8x16xf32>
    %cst_21 = arith.constant 0.000000e+00 : f32
    %56 = vector.broadcast %cst_21 : f32 to vector<8x16xf32>
    %57 = arith.cmpf oge, %55, %56 : vector<8x16xf32>
    %cst_22 = arith.constant 3.000000e-01 : f32
    %58 = vector.broadcast %cst_22 : f32 to vector<8x16xf32>
    %59 = arith.mulf %58, %55 : vector<8x16xf32>
    %60 = arith.select %57, %55, %59 : vector<8x16xi1>, vector<8x16xf32>
    %61 = tpu.concatenate %14, %45, %14 in 1 : vector<8x4xf32>, vector<8x16xf32>, vector<8x4xf32> -> vector<8x24xf32>
    %62 = vector.extract_strided_slice %61 {offsets = [0, 0], sizes = [8, 16], strides = [1, 1]} : vector<8x24xf32> to vector<8x16xf32>
    %63 = vector.extract_strided_slice %61 {offsets = [0, 1], sizes = [8, 16], strides = [1, 1]} : vector<8x24xf32> to vector<8x16xf32>
    %64 = vector.extract_strided_slice %61 {offsets = [0, 2], sizes = [8, 16], strides = [1, 1]} : vector<8x24xf32> to vector<8x16xf32>
    %65 = vector.extract_strided_slice %61 {offsets = [0, 3], sizes = [8, 16], strides = [1, 1]} : vector<8x24xf32> to vector<8x16xf32>
    %66 = vector.extract_strided_slice %61 {offsets = [0, 4], sizes = [8, 16], strides = [1, 1]} : vector<8x24xf32> to vector<8x16xf32>
    %67 = vector.extract_strided_slice %61 {offsets = [0, 5], sizes = [8, 16], strides = [1, 1]} : vector<8x24xf32> to vector<8x16xf32>
    %68 = vector.extract_strided_slice %61 {offsets = [0, 6], sizes = [8, 16], strides = [1, 1]} : vector<8x24xf32> to vector<8x16xf32>
    %69 = vector.extract_strided_slice %61 {offsets = [0, 7], sizes = [8, 16], strides = [1, 1]} : vector<8x24xf32> to vector<8x16xf32>
    %70 = vector.extract_strided_slice %61 {offsets = [0, 8], sizes = [8, 16], strides = [1, 1]} : vector<8x24xf32> to vector<8x16xf32>
    %71 = tpu.concatenate %62, %63, %64, %65, %66, %67, %68, %69, %70 in 0 : vector<8x16xf32>, vector<8x16xf32>, vector<8x16xf32>, vector<8x16xf32>, vector<8x16xf32>, vector<8x16xf32>, vector<8x16xf32>, vector<8x16xf32>, vector<8x16xf32> -> vector<72x16xf32>
    %cst_23 = arith.constant dense<0.000000e+00> : vector<8x16xf32>
    %72 = tpu.matmul %2, %71, %cst_23 {dimension_numbers = #tpu.dot_dimension_numbers<[1], [0], [0], [1], [0, 0, 1, 1], [], []>} : vector<8x72xf32>, vector<72x16xf32>, vector<8x16xf32> -> vector<8x16xf32>
    %73 = arith.addf %72, %12 : vector<8x16xf32>
    %cst_24 = arith.constant 0.000000e+00 : f32
    %74 = vector.broadcast %cst_24 : f32 to vector<8x16xf32>
    %75 = arith.cmpf oge, %73, %74 : vector<8x16xf32>
    %cst_25 = arith.constant 3.000000e-01 : f32
    %76 = vector.broadcast %cst_25 : f32 to vector<8x16xf32>
    %77 = arith.mulf %76, %73 : vector<8x16xf32>
    %78 = arith.select %75, %73, %77 : vector<8x16xi1>, vector<8x16xf32>
    %79 = tpu.concatenate %33, %60, %78, %46 in 0 : vector<8x16xf32>, vector<8x16xf32>, vector<8x16xf32>, vector<8x16xf32> -> vector<32x16xf32>
    %80 = arith.index_cast %c0_i32 : i32 to index
    %c0_26 = arith.constant 0 : index
    %c0_27 = arith.constant 0 : index
    %81 = vector.load %arg7[%80, %c0_26, %c0_27] : memref<1x32x16xf32, #tpu.memory_space<vmem>>, vector<1x32x16xf32>
    %82 = vector.shape_cast %81 : vector<1x32x16xf32> to vector<32x16xf32>
    %83 = vector.shape_cast %79 : vector<32x16xf32> to vector<1x32x16xf32>
    tpu.vector_store %arg7[%80, %c0_26, %c0_27], %83 {strides = array<i32>} : memref<1x32x16xf32, #tpu.memory_space<vmem>>, vector<1x32x16xf32>,
    %c1_i32 = arith.constant 1 : i32
    return
  }
  func.func @transform_0(%arg0: i32) -> (i32, i32, i32) {
    %c0_i32 = arith.constant 0 : i32
    %c0_i32_0 = arith.constant 0 : i32
    %c0_i32_1 = arith.constant 0 : i32
    return %arg0, %c0_i32, %c0_i32_0 : i32, i32, i32
  }
  func.func @transform_1(%arg0: i32) -> (i32, i32) {
    %c0_i32 = arith.constant 0 : i32
    %c0_i32_0 = arith.constant 0 : i32
    %c0_i32_1 = arith.constant 0 : i32
    return %c0_i32, %c0_i32_0 : i32, i32
  }
  func.func @transform_2(%arg0: i32) -> (i32, i32) {
    %c0_i32 = arith.constant 0 : i32
    %c0_i32_0 = arith.constant 0 : i32
    %c0_i32_1 = arith.constant 0 : i32
    return %c0_i32, %c0_i32_0 : i32, i32
  }
  func.func @transform_3(%arg0: i32) -> (i32, i32) {
    %c0_i32 = arith.constant 0 : i32
    %c0_i32_0 = arith.constant 0 : i32
    %c0_i32_1 = arith.constant 0 : i32
    return %c0_i32, %c0_i32_0 : i32, i32
  }
  func.func @transform_4(%arg0: i32) -> (i32, i32) {
    %c0_i32 = arith.constant 0 : i32
    %c0_i32_0 = arith.constant 0 : i32
    %c0_i32_1 = arith.constant 0 : i32
    return %c0_i32, %c0_i32_0 : i32, i32
  }
  func.func @transform_5(%arg0: i32) -> (i32, i32) {
    %c0_i32 = arith.constant 0 : i32
    %c0_i32_0 = arith.constant 0 : i32
    %c0_i32_1 = arith.constant 0 : i32
    return %c0_i32, %c0_i32_0 : i32, i32
  }
  func.func @transform_6(%arg0: i32) -> (i32, i32, i32) {
    %c0_i32 = arith.constant 0 : i32
    %c0_i32_0 = arith.constant 0 : i32
    %c0_i32_1 = arith.constant 0 : i32
    return %arg0, %c0_i32, %c0_i32_0 : i32, i32, i32
  }
}

</mosaic_0001>

<llo_original>
// kernel: inception_blk.1
$region0: #{inception_blk.1}
  #allocation0 [shape = 'u32[]', space=smem, size = 0x4, offset = 0x4, fixed_abs, tag = 'smem constant byte address 0x4 - core index']
  #allocation1 [shape = 'u32[144,128]{1,0:T(1,128)}', space=vmem, size = 0x12000, scoped, tag = 'internal scratch']
  %s0 = inlined_call_operand.vmem [shape: f32[2,4,16], index: 0, kind: input, shape index: {}]
  %s1 = inlined_call_operand.vmem [shape: f32[32,8], index: 1, kind: input, shape index: {}]
  %s2 = inlined_call_operand.vmem [shape: f32[32,1], index: 2, kind: input, shape index: {}]
  %s3 = inlined_call_operand.vmem [shape: f32[8,40], index: 3, kind: input, shape index: {}]
  %s4 = inlined_call_operand.vmem [shape: f32[8,72], index: 4, kind: input, shape index: {}]
  %s5 = inlined_call_operand.vmem [shape: f32[16,1], index: 5, kind: input, shape index: {}]
  %s6 = inlined_call_operand.vmem [shape: f32[2,32,16], index: 6, kind: output, shape index: {}]
  %s7 = sld [smem:[#allocation0]]
  $region57: #{inception_blk.1} parent=0
    _
  %s9 = ssub.s32 1, %s7
  %s10 = scalar_select 0, %s9, %s7
  loop: start=0, step=1, limit=4
  $region2: #{inception_blk.1} parent=0 // loop_pre_header
    _
  $region3: #{inception_blk.1} parent=0 // loop_header
    %s12 = sphi 0, %s16
    %p13 = scmp.ge.s32.totalorder %s12, 4
    %s22 = sphi 0, %s24
    %s25 = sphi 0, %s22
    %s26 = sphi 0, %s25
    %s42 = sphi 0, %s26
    %s46 = sphi 0, %s46
    %s48 = sphi 0, %s46
    %s49 = sphi 0, %s48
    %s63 = sphi 0, %s49
    %s67 = sphi 0, %s67
    %s69 = sphi 0, %s67
    %s70 = sphi 0, %s69
    %s84 = sphi 0, %s70
    %s88 = sphi 0, %s88
    %s90 = sphi 0, %s88
    %s91 = sphi 0, %s90
    %s105 = sphi 0, %s91
    %s109 = sphi 0, %s109
    %s111 = sphi 0, %s109
    %s112 = sphi 0, %s111
    %s126 = sphi 0, %s112
    %s130 = sphi 0, %s130
    %s132 = sphi 0, %s130
    %s133 = sphi 0, %s132
    %s147 = sphi 0, %s133
    %s153 = sphi 0, %s155
    %s156 = sphi 0, %s153
    %s157 = sphi 0, %s156
    %s173 = sphi 0, %s157
  $region4: #{inception_blk.1} parent=0 // loop_header_branch
    %15 = sbr.rel (%p13) target = $region8
  $region5: #{inception_blk.1} parent=0 // loop_body
    %s17 = ssub.s32 %s12, 1
    %s18 = ssub.s32 %s12, 2
    %s19 = sadd.s32 %s12, 1
    %s20 = ssub.s32 %s12, %s19
    %p21 = scmp.eq.s32.totalorder %s20, 0
    %s23 = sadd.s32 %s22, 1
    %s24 = scalar_select %p21, %s22, %s23
    %p27 = pneg %p21
    %p28 = scmp.eq.s32.totalorder %s12, 1
    %p29 = por %p27, %p28
    %p30 = scmp.ne.s32.totalorder %s22, %s25
    %p31 = scmp.eq.s32.totalorder %s12, 0
    %p32 = por %p30, %p31
    %p33 = scmp.ne.s32.totalorder %s22, %s25
    %p34 = scmp.eq.s32.totalorder %s17, 1
    %p35 = por %p33, %p34
    %p36 = scmp.ne.s32.totalorder %s25, %s26
    %p37 = scmp.eq.s32.totalorder %s17, 0
    %p38 = por %p36, %p37
    %p39 = scmp.ne.s32.totalorder %s25, %s26
    %p40 = scmp.eq.s32.totalorder %s18, 1
    %p41 = por %p39, %p40
    %p43 = scmp.ne.s32.totalorder %s26, %s42
    %p44 = scmp.eq.s32.totalorder %s18, 0
    %p45 = por %p43, %p44
    %s47 = sadd.s32 %s46, 1
    %p50 = scmp.eq.s32.totalorder %s12, 1
    %p51 = scmp.ne.s32.totalorder %s46, %s48
    %p52 = scmp.eq.s32.totalorder %s12, 0
    %p53 = por %p51, %p52
    %p54 = scmp.ne.s32.totalorder %s46, %s48
    %p55 = scmp.eq.s32.totalorder %s17, 1
    %p56 = por %p54, %p55
    %p57 = scmp.ne.s32.totalorder %s48, %s49
    %p58 = scmp.eq.s32.totalorder %s17, 0
    %p59 = por %p57, %p58
    %p60 = scmp.ne.s32.totalorder %s48, %s49
    %p61 = scmp.eq.s32.totalorder %s18, 1
    %p62 = por %p60, %p61
    %p64 = scmp.ne.s32.totalorder %s49, %s63
    %p65 = scmp.eq.s32.totalorder %s18, 0
    %p66 = por %p64, %p65
    %s68 = sadd.s32 %s67, 1
    %p71 = scmp.eq.s32.totalorder %s12, 1
    %p72 = scmp.ne.s32.totalorder %s67, %s69
    %p73 = scmp.eq.s32.totalorder %s12, 0
    %p74 = por %p72, %p73
    %p75 = scmp.ne.s32.totalorder %s67, %s69
    %p76 = scmp.eq.s32.totalorder %s17, 1
    %p77 = por %p75, %p76
    %p78 = scmp.ne.s32.totalorder %s69, %s70
    %p79 = scmp.eq.s32.totalorder %s17, 0
    %p80 = por %p78, %p79
    %p81 = scmp.ne.s32.totalorder %s69, %s70
    %p82 = scmp.eq.s32.totalorder %s18, 1
    %p83 = por %p81, %p82
    %p85 = scmp.ne.s32.totalorder %s70, %s84
    %p86 = scmp.eq.s32.totalorder %s18, 0
    %p87 = por %p85, %p86
    %s89 = sadd.s32 %s88, 1
    %p92 = scmp.eq.s32.totalorder %s12, 1
    %p93 = scmp.ne.s32.totalorder %s88, %s90
    %p94 = scmp.eq.s32.totalorder %s12, 0
    %p95 = por %p93, %p94
    %p96 = scmp.ne.s32.totalorder %s88, %s90
    %p97 = scmp.eq.s32.totalorder %s17, 1
    %p98 = por %p96, %p97
    %p99 = scmp.ne.s32.totalorder %s90, %s91
    %p100 = scmp.eq.s32.totalorder %s17, 0
    %p101 = por %p99, %p100
    %p102 = scmp.ne.s32.totalorder %s90, %s91
    %p103 = scmp.eq.s32.totalorder %s18, 1
    %p104 = por %p102, %p103
    %p106 = scmp.ne.s32.totalorder %s91, %s105
    %p107 = scmp.eq.s32.totalorder %s18, 0
    %p108 = por %p106, %p107
    %s110 = sadd.s32 %s109, 1
    %p113 = scmp.eq.s32.totalorder %s12, 1
    %p114 = scmp.ne.s32.totalorder %s109, %s111
    %p115 = scmp.eq.s32.totalorder %s12, 0
    %p116 = por %p114, %p115
    %p117 = scmp.ne.s32.totalorder %s109, %s111
    %p118 = scmp.eq.s32.totalorder %s17, 1
    %p119 = por %p117, %p118
    %p120 = scmp.ne.s32.totalorder %s111, %s112
    %p121 = scmp.eq.s32.totalorder %s17, 0
    %p122 = por %p120, %p121
    %p123 = scmp.ne.s32.totalorder %s111, %s112
    %p124 = scmp.eq.s32.totalorder %s18, 1
    %p125 = por %p123, %p124
    %p127 = scmp.ne.s32.totalorder %s112, %s126
    %p128 = scmp.eq.s32.totalorder %s18, 0
    %p129 = por %p127, %p128
    %s131 = sadd.s32 %s130, 1
    %p134 = scmp.eq.s32.totalorder %s12, 1
    %p135 = scmp.ne.s32.totalorder %s130, %s132
    %p136 = scmp.eq.s32.totalorder %s12, 0
    %p137 = por %p135, %p136
    %p138 = scmp.ne.s32.totalorder %s130, %s132
    %p139 = scmp.eq.s32.totalorder %s17, 1
    %p140 = por %p138, %p139
    %p141 = scmp.ne.s32.totalorder %s132, %s133
    %p142 = scmp.eq.s32.totalorder %s17, 0
    %p143 = por %p141, %p142
    %p144 = scmp.ne.s32.totalorder %s132, %s133
    %p145 = scmp.eq.s32.totalorder %s18, 1
    %p146 = por %p144, %p145
    %p148 = scmp.ne.s32.totalorder %s133, %s147
    %p149 = scmp.eq.s32.totalorder %s18, 0
    %p150 = por %p148, %p149
    %s151 = ssub.s32 %s12, %s19
    %p152 = scmp.eq.s32.totalorder %s151, 0
    %s154 = sadd.s32 %s153, 1
    %s155 = scalar_select %p152, %s153, %s154
    %p158 = pneg %p152
    %p159 = scmp.eq.s32.totalorder %s12, 1
    %p160 = por %p158, %p159
    %p161 = scmp.ne.s32.totalorder %s153, %s156
    %p162 = scmp.eq.s32.totalorder %s12, 0
    %p163 = por %p161, %p162
    %p164 = scmp.ne.s32.totalorder %s153, %s156
    %p165 = scmp.eq.s32.totalorder %s17, 1
    %p166 = por %p164, %p165
    %p167 = scmp.ne.s32.totalorder %s156, %s157
    %p168 = scmp.eq.s32.totalorder %s17, 0
    %p169 = por %p167, %p168
    %p170 = scmp.ne.s32.totalorder %s156, %s157
    %p171 = scmp.eq.s32.totalorder %s18, 1
    %p172 = por %p170, %p171
    %p174 = scmp.ne.s32.totalorder %s157, %s173
    %p175 = scmp.eq.s32.totalorder %s18, 0
    %p176 = por %p174, %p175
    %p177 = scmp.le.s32.totalorder 1, %s12
    %p178 = scmp.lt.s32.totalorder %s12, 3
    %p179 = pnand %p177, %p178
    %p180 = pneg %p179
    // Predicated region
    $region9: #{inception_blk.1} parent=5 // pred_check
      _
    $region10: #{inception_blk.1} parent=5 // pred_check_branch
      %182 = sbr.rel (%p179) target = $region12
    $region11: #{inception_blk.1} parent=5 // pred_region
      %s183 = ssub.s32 %s12, 1
      // Predicated region
      $region13: #{inception_blk.1} parent=11 // pred_check
        %p184 = pneg %p59
      $region14: #{inception_blk.1} parent=11 // pred_check_branch
        %186 = sbr.rel (%p184) target = $region16
      $region15: #{inception_blk.1} parent=11 // pred_region
        _
      $region16: #{inception_blk.1} parent=11 // pred_fallthru
        _
      // Predicated region
      $region17: #{inception_blk.1} parent=11 // pred_check
        %p187 = pneg %p80
      $region18: #{inception_blk.1} parent=11 // pred_check_branch
        %189 = sbr.rel (%p187) target = $region20
      $region19: #{inception_blk.1} parent=11 // pred_region
        _
      $region20: #{inception_blk.1} parent=11 // pred_fallthru
        _
      // Predicated region
      $region21: #{inception_blk.1} parent=11 // pred_check
        %p190 = pneg %p101
      $region22: #{inception_blk.1} parent=11 // pred_check_branch
        %192 = sbr.rel (%p190) target = $region24
      $region23: #{inception_blk.1} parent=11 // pred_region
        _
      $region24: #{inception_blk.1} parent=11 // pred_fallthru
        _
      // Predicated region
      $region25: #{inception_blk.1} parent=11 // pred_check
        %p193 = pneg %p122
      $region26: #{inception_blk.1} parent=11 // pred_check_branch
        %195 = sbr.rel (%p193) target = $region28
      $region27: #{inception_blk.1} parent=11 // pred_region
        _
      $region28: #{inception_blk.1} parent=11 // pred_fallthru
        _
      // Predicated region
      $region29: #{inception_blk.1} parent=11 // pred_check
        %p196 = pneg %p143
      $region30: #{inception_blk.1} parent=11 // pred_check_branch
        %198 = sbr.rel (%p196) target = $region32
      $region31: #{inception_blk.1} parent=11 // pred_region
        _
      $region32: #{inception_blk.1} parent=11 // pred_fallthru
        _
    $region12: #{inception_blk.1} parent=5 // pred_fallthru
      _
    %p199 = scmp.lt.s32.totalorder %s12, 2
    // Predicated region
    $region33: #{inception_blk.1} parent=5 // pred_check
      %p200 = pneg %p199
    $region34: #{inception_blk.1} parent=5 // pred_check_branch
      %202 = sbr.rel (%p200) target = $region36
    $region35: #{inception_blk.1} parent=5 // pred_region
      // Predicated region
      $region37: #{inception_blk.1} parent=35 // pred_check
        %p203 = pneg %p32
      $region38: #{inception_blk.1} parent=35 // pred_check_branch
        %205 = sbr.rel (%p203) target = $region40
      $region39: #{inception_blk.1} parent=35 // pred_region
        %p206 = scmp.lt.s32.totalorder %s12, 1
        %s207 = scalar_select %p206, %s12, 1
        %s208 = smul.addr %s207, 4
        %s209 = scalar_lea.vmem %s0, %s208
      $region40: #{inception_blk.1} parent=35 // pred_fallthru
        _
    $region36: #{inception_blk.1} parent=5 // pred_fallthru
      _
    %p210 = scmp.le.s32.totalorder 1, %s12
    %p211 = scmp.lt.s32.totalorder %s12, 3
    %p212 = pnand %p210, %p211
    %p213 = pneg %p212
    // Predicated region
    $region41: #{inception_blk.1} parent=5 // pred_check
      _
    $region42: #{inception_blk.1} parent=5 // pred_check_branch
      %215 = sbr.rel (%p212) target = $region44
    $region43: #{inception_blk.1} parent=5 // pred_region
      %s216 = ssub.s32 %s12, 1
      %p217 = scmp.lt.s32.totalorder %s17, 1
      %s218 = scalar_select %p217, %s17, 1
      %s219 = smul.addr %s218, 4
      %s220 = scalar_lea.vmem %s0, %s219
      %p221 = pneg %p38
      %p222 = pneg %p35
      %p223 = pneg %p59
      %p224 = pneg %p56
      %p225 = pneg %p80
      %p226 = pneg %p77
      %p227 = pneg %p101
      %p228 = pneg %p98
      %p229 = pneg %p122
      %p230 = pneg %p119
      %p231 = pneg %p143
      %p232 = pneg %p140
      %p233 = pneg %p169
      %p234 = pneg %p166
      %p235 = scmp.lt.s32.totalorder %s17, 1
      %s236 = scalar_select %p235, %s17, 1
      %s237 = smul.addr %s236, 4
      %s238 = smul.addr %s237, 8
      %s239 = scalar_lea.vmem %s6, %s238
      %p240 = scmp.lt.s32.totalorder %s17, 1
      %s241 = scalar_select %p240, %s17, 1
      %s242 = smul.addr %s241, 4
      %s243 = scalar_lea.vmem %s0, %s242
      %p244 = scmp.lt.s32.totalorder %s17, 1
      %s245 = scalar_select %p244, %s17, 1
      %s246 = smul.addr %s245, 4
      %s247 = smul.addr %s246, 8
      %s248 = scalar_lea.vmem %s6, %s247
      %v249 = vld [vmem:[%s1] sm:$0xff]
      %v250 = vld [vmem:[%s1 + $0x8] sm:$0xff]
      %v251 = vld [vmem:[%s1 + $0x10] sm:$0xff]
      %v252 = vld [vmem:[%s1 + $0x18] sm:$0xff]
      %v253 = vld [vmem:[%s3] sm:$0xff]
      %v254 = vld [vmem:[%s4] sm:$0xff]
      %v255 = vld [vmem:[%s2] sm:$0xff]
      %v256 = vld [vmem:[%s2 + $0x8] sm:$0xff]
      %v257 = vld [vmem:[%s2 + $0x10] sm:$0xff]
      %v258 = vld [vmem:[%s2 + $0x18] sm:$0xff]
      %v259 = vld [vmem:[%s5] sm:$0xff]
      %v260 = vld [vmem:[%s5 + $0x8] sm:$0xff]
      %262 = vset.pattern.permute.xlu0 0
      %263 = vperm.xlu0 %262, %v255
      %v264 = vpop.permute.xlu0 %263
      %267 = vset.pattern.permute.xlu0 0
      %268 = vperm.xlu0 %267, %v256
      %v269 = vpop.permute.xlu0 %268
      %272 = vset.pattern.permute.xlu0 0
      %273 = vperm.xlu0 %272, %v257
      %v274 = vpop.permute.xlu0 %273
      %277 = vset.pattern.permute.xlu0 0
      %278 = vperm.xlu0 %277, %v258
      %v279 = vpop.permute.xlu0 %278
      %282 = vset.pattern.permute.xlu0 0
      %283 = vperm.xlu0 %282, %v259
      %v284 = vpop.permute.xlu0 %283
      %287 = vset.pattern.permute.xlu0 0
      %288 = vperm.xlu0 %287, %v260
      %v289 = vpop.permute.xlu0 %288
      %v291 = vld [vmem:[%s243] sm:$0xf]
      %293 = vrot.lane.b32.xlu0 %v291, 1
      %v294 = vpop.permute.xlu0 %293
      %vm296 = vcmask 7168
      %v297 = vsel %vm296, -inf, %v294
      %298 = vrot.lane.b32.xlu0 %v291, 127
      %v299 = vpop.permute.xlu0 %298
      %vm301 = vcmask 121856
      %v302 = vsel %vm301, %v299, -inf
      %v303 = vmax.f32 %v297, %v291
      %v304 = vmax.f32 %v303, %v302
      %v306 = vrot.slane %v304, 4
      %vm308 = vcmask 1043456
      %v309 = vsel %vm308, %v291, %v306
      %vm310 = vcmask 64512
      %v312 = vsel %vm310, %v249, 0
      %v315 = vsel %vm310, %v250, 0
      %v318 = vsel %vm310, %v251, 0
      %v321 = vsel %vm310, %v252, 0
      %323 = vmatprep.subr.mxu0 0.0
      %324 = vmatpush1.msra.mxu0 0.0
      %325 = vmatprep.subr.mxu0 0.0
      %326 = vmatpush1.msra.mxu0 0.0
      %327 = vmatprep.subr.mxu0 0.0
      %328 = vmatpush1.msra.mxu0 0.0
      %329 = vmatprep.subr.mxu0 0.0
      %330 = vmatpush1.msra.mxu0 0.0
      %331 = vmatprep.subr.mxu0 0.0
      %332 = vmatpush1.msra.mxu0 0.0
      %333 = vmatprep.subr.mxu0 0.0
      %334 = vmatpush1.msra.mxu0 0.0
      %335 = vmatprep.subr.mxu0 0.0
      %336 = vmatpush1.msra.mxu0 0.0
      %337 = vmatprep.subr.mxu0 0.0
      %338 = vmatpush1.msra.mxu0 0.0
      %339 = vmatprep.subr.mxu0 0.0
      %340 = vmatpush1.msra.mxu0 0.0
      %341 = vmatprep.subr.mxu0 0.0
      %342 = vmatpush1.msra.mxu0 0.0
      %343 = vmatprep.subr.mxu0 0.0
      %344 = vmatpush1.msra.mxu0 0.0
      %345 = vmatprep.subr.mxu0 0.0
      %346 = vmatpush1.msra.mxu0 0.0
      %347 = vmatprep.subr.mxu0 0.0
      %348 = vmatpush1.msra.mxu0 0.0
      %349 = vmatprep.subr.mxu0 0.0
      %350 = vmatpush1.msra.mxu0 0.0
      %351 = vmatprep.subr.mxu0 0.0
      %352 = vmatpush1.msra.mxu0 0.0
      %353 = vmatprep.subr.mxu0 0.0
      %354 = vmatpush1.msra.mxu0 %v309
      %355 = vmatprep.subr.mxu0 0.0
      %356 = vmatpush2.msra.mxu0 0.0
      %357 = vmatprep.subr.mxu0 0.0
      %358 = vmatpush2.msra.mxu0 0.0
      %359 = vmatprep.subr.mxu0 0.0
      %360 = vmatpush2.msra.mxu0 0.0
      %361 = vmatprep.subr.mxu0 0.0
      %362 = vmatpush2.msra.mxu0 0.0
      %363 = vmatprep.subr.mxu0 0.0
      %364 = vmatpush2.msra.mxu0 0.0
      %365 = vmatprep.subr.mxu0 0.0
      %366 = vmatpush2.msra.mxu0 0.0
      %367 = vmatprep.subr.mxu0 0.0
      %368 = vmatpush2.msra.mxu0 0.0
      %369 = vmatprep.subr.mxu0 0.0
      %370 = vmatpush2.msra.mxu0 0.0
      %371 = vmatprep.subr.mxu0 0.0
      %372 = vmatpush2.msra.mxu0 0.0
      %373 = vmatprep.subr.mxu0 0.0
      %374 = vmatpush2.msra.mxu0 0.0
      %375 = vmatprep.subr.mxu0 0.0
      %376 = vmatpush2.msra.mxu0 0.0
      %377 = vmatprep.subr.mxu0 0.0
      %378 = vmatpush2.msra.mxu0 0.0
      %379 = vmatprep.subr.mxu0 0.0
      %380 = vmatpush2.msra.mxu0 0.0
      %381 = vmatprep.subr.mxu0 0.0
      %382 = vmatpush2.msra.mxu0 0.0
      %383 = vmatprep.subr.mxu0 0.0
      %384 = vmatpush2.msra.mxu0 0.0
      %385 = vmatprep.subr.mxu0 0.0
      %386 = vmatpush2.msra.mxu0 0.0
      %387 = vmatprep.mubr.f32.mxu0 0.0
      %388 = vmatmul.mubr.f32.gmra.mxu0 %v312
      %v389 = vpop.f32.mrf.mxu0
      %v390 = vadd.f32 %v264, %v389
      %v391 = vpop.f32.mrf.mxu0
      %392 = vmatprep.mubr.f32.mxu0 0.0
      %393 = vmatmul.mubr.f32.gmra.mxu0 %v315
      %v394 = vpop.f32.mrf.mxu0
      %v395 = vadd.f32 %v269, %v394
      %v396 = vpop.f32.mrf.mxu0
      %397 = vmatprep.mubr.f32.mxu0 0.0
      %398 = vmatmul.mubr.f32.gmra.mxu0 %v318
      %v399 = vpop.f32.mrf.mxu0
      %v400 = vadd.f32 %v274, %v399
      %v401 = vpop.f32.mrf.mxu0
      %402 = vmatprep.mubr.f32.mxu0 0.0
      %403 = vmatmul.mubr.f32.gmra.mxu0 %v321
      %v404 = vpop.f32.mrf.mxu0
      %v405 = vadd.f32 %v279, %v404
      %v406 = vpop.f32.mrf.mxu0
      %407 = vdwg.mxu0
      %vm408 = vcmp.ge.f32.partialorder %v390, 0.0
      %v409 = vmul.f32 %v390, 0.3
      %v410 = vsel %vm408, %v390, %v409
      %vm411 = vcmp.ge.f32.partialorder %v395, 0.0
      %v412 = vmul.f32 %v395, 0.3
      %v413 = vsel %vm411, %v395, %v412
      %vm414 = vcmp.ge.f32.partialorder %v400, 0.0
      %v415 = vmul.f32 %v400, 0.3
      %v416 = vsel %vm414, %v400, %v415
      %418 = vrot.lane.b32.xlu0 %v413, 2
      %v419 = vpop.permute.xlu0 %418
      %vm421 = vcmask 15360
      %v422 = vsel %vm421, 0.0, %v419
      %vm423 = vcmask 146432
      %v424 = vsel %vm423, %v422, 0.0
      %426 = vrot.lane.b32.xlu0 %v424, 127
      %v427 = vpop.permute.xlu0 %426
      %429 = vrot.lane.b32.xlu0 %v424, 126
      %v430 = vpop.permute.xlu0 %429
      %432 = vrot.lane.b32.xlu0 %v424, 125
      %v433 = vpop.permute.xlu0 %432
      %435 = vrot.lane.b32.xlu0 %v424, 124
      %v436 = vpop.permute.xlu0 %435
      %vm438 = vcmask 326656
      %v440 = vsel %vm438, %v253, 0
      %442 = vmatprep.subr.mxu0 0.0
      %443 = vmatpush1.msra.mxu0 0.0
      %444 = vmatprep.subr.mxu0 0.0
      %445 = vmatpush1.msra.mxu0 0.0
      %446 = vmatprep.subr.mxu0 0.0
      %447 = vmatpush1.msra.mxu0 0.0
      %448 = vmatprep.subr.mxu0 0.0
      %449 = vmatpush1.msra.mxu0 0.0
      %450 = vmatprep.subr.mxu0 0.0
      %451 = vmatpush1.msra.mxu0 0.0
      %452 = vmatprep.subr.mxu0 0.0
      %453 = vmatpush1.msra.mxu0 0.0
      %454 = vmatprep.subr.mxu0 0.0
      %455 = vmatpush1.msra.mxu0 0.0
      %456 = vmatprep.subr.mxu0 0.0
      %457 = vmatpush1.msra.mxu0 0.0
      %458 = vmatprep.subr.mxu0 0.0
      %459 = vmatpush1.msra.mxu0 0.0
      %460 = vmatprep.subr.mxu0 0.0
      %461 = vmatpush1.msra.mxu0 0.0
      %462 = vmatprep.subr.mxu0 0.0
      %463 = vmatpush1.msra.mxu0 0.0
      %464 = vmatprep.subr.mxu0 0.0
      %465 = vmatpush1.msra.mxu0 %v436
      %466 = vmatprep.subr.mxu0 0.0
      %467 = vmatpush1.msra.mxu0 %v433
      %468 = vmatprep.subr.mxu0 0.0
      %469 = vmatpush1.msra.mxu0 %v430
      %470 = vmatprep.subr.mxu0 0.0
      %471 = vmatpush1.msra.mxu0 %v427
      %472 = vmatprep.subr.mxu0 0.0
      %473 = vmatpush1.msra.mxu0 %v424
      %474 = vmatprep.subr.mxu0 0.0
      %475 = vmatpush2.msra.mxu0 0.0
      %476 = vmatprep.subr.mxu0 0.0
      %477 = vmatpush2.msra.mxu0 0.0
      %478 = vmatprep.subr.mxu0 0.0
      %479 = vmatpush2.msra.mxu0 0.0
      %480 = vmatprep.subr.mxu0 0.0
      %481 = vmatpush2.msra.mxu0 0.0
      %482 = vmatprep.subr.mxu0 0.0
      %483 = vmatpush2.msra.mxu0 0.0
      %484 = vmatprep.subr.mxu0 0.0
      %485 = vmatpush2.msra.mxu0 0.0
      %486 = vmatprep.subr.mxu0 0.0
      %487 = vmatpush2.msra.mxu0 0.0
      %488 = vmatprep.subr.mxu0 0.0
      %489 = vmatpush2.msra.mxu0 0.0
      %490 = vmatprep.subr.mxu0 0.0
      %491 = vmatpush2.msra.mxu0 0.0
      %492 = vmatprep.subr.mxu0 0.0
      %493 = vmatpush2.msra.mxu0 0.0
      %494 = vmatprep.subr.mxu0 0.0
      %495 = vmatpush2.msra.mxu0 0.0
      %496 = vmatprep.subr.mxu0 0.0
      %497 = vmatpush2.msra.mxu0 0.0
      %498 = vmatprep.subr.mxu0 0.0
      %499 = vmatpush2.msra.mxu0 0.0
      %500 = vmatprep.subr.mxu0 0.0
      %501 = vmatpush2.msra.mxu0 0.0
      %502 = vmatprep.subr.mxu0 0.0
      %503 = vmatpush2.msra.mxu0 0.0
      %504 = vmatprep.subr.mxu0 0.0
      %505 = vmatpush2.msra.mxu0 0.0
      %506 = vmatprep.mubr.f32.mxu0 0.0
      %507 = vmatmul.mubr.f32.gmra.mxu0 %v440
      %v508 = vpop.f32.mrf.mxu0
      %v509 = vadd.f32 %v284, %v508
      %v510 = vpop.f32.mrf.mxu0
      %511 = vdwg.mxu0
      %vm512 = vcmp.ge.f32.partialorder %v509, 0.0
      %v513 = vmul.f32 %v509, 0.3
      %v514 = vsel %vm512, %v509, %v513
      %516 = vrot.lane.b32.xlu0 %v416, 4
      %v517 = vpop.permute.xlu0 %516
      %vm519 = vcmask 31744
      %v520 = vsel %vm519, 0.0, %v517
      %vm521 = vcmask 162816
      %v522 = vsel %vm521, %v520, 0.0
      %524 = vrot.lane.b32.xlu0 %v522, 127
      %v525 = vpop.permute.xlu0 %524
      %527 = vrot.lane.b32.xlu0 %v522, 126
      %v528 = vpop.permute.xlu0 %527
      %530 = vrot.lane.b32.xlu0 %v522, 125
      %v531 = vpop.permute.xlu0 %530
      %533 = vrot.lane.b32.xlu0 %v522, 124
      %v534 = vpop.permute.xlu0 %533
      %536 = vrot.lane.b32.xlu0 %v522, 123
      %v537 = vpop.permute.xlu0 %536
      %539 = vrot.lane.b32.xlu0 %v522, 122
      %v540 = vpop.permute.xlu0 %539
      %542 = vrot.lane.b32.xlu0 %v522, 121
      %v543 = vpop.permute.xlu0 %542
      %545 = vrot.lane.b32.xlu0 %v522, 120
      %v546 = vpop.permute.xlu0 %545
      %vm548 = vcmask 588800
      %v550 = vsel %vm548, %v254, 0
      %552 = vmatprep.subr.mxu0 0.0
      %553 = vmatpush1.msra.mxu0 0.0
      %554 = vmatprep.subr.mxu0 0.0
      %555 = vmatpush1.msra.mxu0 0.0
      %556 = vmatprep.subr.mxu0 0.0
      %557 = vmatpush1.msra.mxu0 0.0
      %558 = vmatprep.subr.mxu0 0.0
      %559 = vmatpush1.msra.mxu0 0.0
      %560 = vmatprep.subr.mxu0 0.0
      %561 = vmatpush1.msra.mxu0 0.0
      %562 = vmatprep.subr.mxu0 0.0
      %563 = vmatpush1.msra.mxu0 0.0
      %564 = vmatprep.subr.mxu0 0.0
      %565 = vmatpush1.msra.mxu0 0.0
      %566 = vmatprep.subr.mxu0 0.0
      %567 = vmatpush1.msra.mxu0 %v546
      %568 = vmatprep.subr.mxu0 0.0
      %569 = vmatpush1.msra.mxu0 %v543
      %570 = vmatprep.subr.mxu0 0.0
      %571 = vmatpush1.msra.mxu0 %v540
      %572 = vmatprep.subr.mxu0 0.0
      %573 = vmatpush1.msra.mxu0 %v537
      %574 = vmatprep.subr.mxu0 0.0
      %575 = vmatpush1.msra.mxu0 %v534
      %576 = vmatprep.subr.mxu0 0.0
      %577 = vmatpush1.msra.mxu0 %v531
      %578 = vmatprep.subr.mxu0 0.0
      %579 = vmatpush1.msra.mxu0 %v528
      %580 = vmatprep.subr.mxu0 0.0
      %581 = vmatpush1.msra.mxu0 %v525
      %582 = vmatprep.subr.mxu0 0.0
      %583 = vmatpush1.msra.mxu0 %v522
      %584 = vmatprep.subr.mxu0 0.0
      %585 = vmatpush2.msra.mxu0 0.0
      %586 = vmatprep.subr.mxu0 0.0
      %587 = vmatpush2.msra.mxu0 0.0
      %588 = vmatprep.subr.mxu0 0.0
      %589 = vmatpush2.msra.mxu0 0.0
      %590 = vmatprep.subr.mxu0 0.0
      %591 = vmatpush2.msra.mxu0 0.0
      %592 = vmatprep.subr.mxu0 0.0
      %593 = vmatpush2.msra.mxu0 0.0
      %594 = vmatprep.subr.mxu0 0.0
      %595 = vmatpush2.msra.mxu0 0.0
      %596 = vmatprep.subr.mxu0 0.0
      %597 = vmatpush2.msra.mxu0 0.0
      %598 = vmatprep.subr.mxu0 0.0
      %599 = vmatpush2.msra.mxu0 0.0
      %600 = vmatprep.subr.mxu0 0.0
      %601 = vmatpush2.msra.mxu0 0.0
      %602 = vmatprep.subr.mxu0 0.0
      %603 = vmatpush2.msra.mxu0 0.0
      %604 = vmatprep.subr.mxu0 0.0
      %605 = vmatpush2.msra.mxu0 0.0
      %606 = vmatprep.subr.mxu0 0.0
      %607 = vmatpush2.msra.mxu0 0.0
      %608 = vmatprep.subr.mxu0 0.0
      %609 = vmatpush2.msra.mxu0 0.0
      %610 = vmatprep.subr.mxu0 0.0
      %611 = vmatpush2.msra.mxu0 0.0
      %612 = vmatprep.subr.mxu0 0.0
      %613 = vmatpush2.msra.mxu0 0.0
      %614 = vmatprep.subr.mxu0 0.0
      %615 = vmatpush2.msra.mxu0 0.0
      %616 = vmatprep.mubr.f32.mxu0 0.0
      %617 = vmatmul.mubr.f32.gmra.mxu0 %v550
      %v618 = vpop.f32.mrf.mxu0
      %v619 = vadd.f32 %v289, %v618
      %v620 = vpop.f32.mrf.mxu0
      %621 = vdwg.mxu0
      %vm622 = vcmp.ge.f32.partialorder %v619, 0.0
      %v623 = vmul.f32 %v619, 0.3
      %v624 = vsel %vm622, %v619, %v623
      %vm625 = vcmask 130048
      %626 = vst.msk [vmem:[%s248] sm:$0xff] %vm625, %v410
      %627 = vst.msk [vmem:[%s248 + $0x8] sm:$0xff] %vm625, %v514
      %628 = vst.msk [vmem:[%s248 + $0x10] sm:$0xff] %vm625, %v624
      %629 = vst.msk [vmem:[%s248 + $0x18] sm:$0xff] %vm625, %v405
      %p630 = scmp.lt.s32.totalorder %s17, 1
      %s631 = scalar_select %p630, %s17, 1
      %s632 = smul.addr %s631, 4
      %s633 = smul.addr %s632, 8
      %s634 = scalar_lea.vmem %s6, %s633
      // Predicated region
      $region45: #{inception_blk.1} parent=43 // pred_check
        %p635 = pneg %p166
      $region46: #{inception_blk.1} parent=43 // pred_check_branch
        %637 = sbr.rel (%p635) target = $region48
      $region47: #{inception_blk.1} parent=43 // pred_region
        _
      $region48: #{inception_blk.1} parent=43 // pred_fallthru
        _
    $region44: #{inception_blk.1} parent=5 // pred_fallthru
      _
    %p638 = scmp.le.s32.totalorder 2, %s12
    // Predicated region
    $region49: #{inception_blk.1} parent=5 // pred_check
      %p639 = pneg %p638
    $region50: #{inception_blk.1} parent=5 // pred_check_branch
      %641 = sbr.rel (%p639) target = $region52
    $region51: #{inception_blk.1} parent=5 // pred_region
      %s642 = ssub.s32 %s12, 2
      // Predicated region
      $region53: #{inception_blk.1} parent=51 // pred_check
        %p643 = pneg %p172
      $region54: #{inception_blk.1} parent=51 // pred_check_branch
        %645 = sbr.rel (%p643) target = $region56
      $region55: #{inception_blk.1} parent=51 // pred_region
        %p646 = scmp.lt.s32.totalorder %s18, 1
        %s647 = scalar_select %p646, %s18, 1
        %s648 = smul.addr %s647, 4
        %s649 = smul.addr %s648, 8
        %s650 = scalar_lea.vmem %s6, %s649
      $region56: #{inception_blk.1} parent=51 // pred_fallthru
        _
    $region52: #{inception_blk.1} parent=5 // pred_fallthru
      _
  $region6: #{inception_blk.1} parent=0 // loop_footer
    %s16 = sadd.s32 1, %s12
  $region7: #{inception_blk.1} parent=0 // loop_footer_branch
    %11 = sbr.rel target = $region3
  $region8: #{inception_blk.1} parent=0 // loop_exit
    _

</llo_original>
